<compile_context>
chip_gen: v7x
topology: tpu7x:2x2x1
jax: 0.10.0
libtpu: 0.0.40
codegen_flags: <defaults>
</compile_context>

<pallas_src>
import jax
import jax.numpy as jnp
from jax.experimental import pallas as pl
from jax.experimental.pallas import tpu as pltpu


LANE = 128  # feature dims padded to a multiple of the TPU lane width


def _round_up(n: int, m: int) -> int:
    return ((n + m - 1) // m) * m


def _vmem_ceiling_bytes() -> int:
    """~7/8 of per-core VMEM: ~56 MiB on v7x, ~112 MiB on v5e/v6e."""
    try:
        cap = int(pltpu.get_tpu_info().vmem_capacity_bytes)
    except Exception:
        cap = 64 << 20  # conservative default: v7x per-TC VMEM
    return (cap * 7) // 8


def _choose_row_tile(M: int, tm_max: int = 512) -> int:
    """Largest 8-multiple row tile <= tm_max that still gives >= 2 grid steps."""
    tm = min(tm_max, _round_up(M, 8))
    # Keep >= 2 grid steps so ("parallel",) can shard across v7x's 2 TensorCores.
    while tm > 8 and pl.cdiv(M, tm) < 2:
        tm = max(8, _round_up(tm // 2, 8))
    return max(tm, 8)


def _make_ffnn_kernel(num_linear_layers: int, compute_dtype):
    """Fused kernel for `num_linear_layers` Linear layers with ReLU between them.

    Ref order: x_ref, (w_ref, b_ref) * num_linear_layers, out_ref.
    """

    def kernel(*refs):
        x_ref = refs[0]
        out_ref = refs[-1]
        # f32 -> bf16 cast happens here (VPU), not in a wrapper pre-pass.
        h = x_ref[...].astype(compute_dtype)
        for i in range(num_linear_layers):
            w_ref = refs[1 + 2 * i]
            b_ref = refs[2 + 2 * i]
            z = (
                jnp.dot(h, w_ref[...], preferred_element_type=jnp.float32)
                + b_ref[...]  # f32 bias, broadcast over rows
            )
            if i < num_linear_layers - 1:
                h = jnp.maximum(z, 0.0).astype(compute_dtype)  # ReLU, bf16 into next MXU
            else:
                h = z  # final logits stay f32 until the output cast
        out_ref[...] = h.astype(out_ref.dtype)

    return kernel


def ffnn_forward(
    embeddings: jax.Array,
    params,
    *,
    tm_max: int = 512,
    compute_dtype=jnp.bfloat16,
    out_dtype=None,
) -> jax.Array:
    """Forward pass equivalent to FFNN.forward.

    embeddings: (batch, max_length, embedding_dim) float32
    params: list of (W, b) with W shape (in_dim, out_dim), b shape (1, out_dim)
    returns: (batch, max_length, output_dim) in `out_dtype` (default: input dtype)
    """
    B, L, E = embeddings.shape
    M = B * L
    n_layers = len(params)
    out_dim = params[-1][0].shape[1]
    if out_dtype is None:
        out_dtype = embeddings.dtype

    # ---- activations: no padding, no cast (done in-kernel); ragged last block ----
    x_flat = embeddings.reshape(M, E)
    tm = _choose_row_tile(M, tm_max)
    grid = (pl.cdiv(M, tm),)

    # ---- weights/biases: one-time zero-pad of feature dims to lane multiples -----
    # Zero padding is exact: padded hidden units get zero weight + zero bias, ReLU
    # keeps them at 0, and they never influence real outputs; padded logit columns
    # are sliced off at the end.  Layer 0 keeps the unpadded K = E to match x.
    O_pad = _round_up(out_dim, LANE)
    padded_params = []
    in_dim = E
    for (w, b) in params:
        din, dout = w.shape
        dout_pad = _round_up(dout, LANE)
        w_pad = (
            jnp.zeros((in_dim, dout_pad), compute_dtype)
            .at[:din, :dout]
            .set(w.astype(compute_dtype))
        )
        b_pad = (
            jnp.zeros((1, dout_pad), jnp.float32)
            .at[:, :dout]
            .set(b.astype(jnp.float32))
        )
        padded_params.append((w_pad, b_pad))
        in_dim = dout_pad

    kernel = _make_ffnn_kernel(n_layers, compute_dtype)

    flat_args = [x_flat]
    for w_pad, b_pad in padded_params:
        flat_args.append(w_pad)
        flat_args.append(b_pad)

    # ---- advisory cost estimate for the XLA scheduler -----------------------------
    wb_bytes = sum(
        w.size * w.dtype.itemsize + b.size * b.dtype.itemsize
        for w, b in padded_params
    )
    flops = 2 * M * sum(int(w.shape[0]) * int(w.shape[1]) for w, _ in padded_params)
    bytes_accessed = (
        M * E * embeddings.dtype.itemsize
        + wb_bytes
        + M * O_pad * jnp.dtype(out_dtype).itemsize
    )
    cost = pl.CostEstimate(flops=flops, transcendentals=0, bytes_accessed=bytes_accessed)

    # ---- VMEM budget (generation-aware ceiling, no weight double-counting) --------
    vmem_ceiling = _vmem_ceiling_bytes()
    max_feat = max([E, O_pad] + [int(w.shape[1]) for w, _ in padded_params])
    x_blk_bytes = tm * E * embeddings.dtype.itemsize
    out_blk_bytes = tm * O_pad * jnp.dtype(out_dtype).itemsize

    def _run(weight_pipeline_mode, weight_buffers):
        vmem_est = (
            2 * x_blk_bytes                 # x block, double-buffered
            + 2 * out_blk_bytes             # out block, double-buffered
            + weight_buffers * wb_bytes     # resident weights/biases
            + 4 * tm * max_feat * 4         # f32 intermediates headroom
        )
        vmem_limit = int(min(vmem_ceiling, max(32 << 20, 2 * vmem_est)))

        def weight_spec(shape):
            if weight_pipeline_mode is None:
                return pl.BlockSpec(shape, lambda i: (0, 0))
            return pl.BlockSpec(shape, lambda i: (0, 0), pipeline_mode=weight_pipeline_mode)

        in_specs = [pl.BlockSpec((tm, E), lambda i: (i, 0))]
        for w_pad, b_pad in padded_params:
            in_specs.append(weight_spec(w_pad.shape))
            in_specs.append(weight_spec(b_pad.shape))

        return pl.pallas_call(
            kernel,
            out_shape=jax.ShapeDtypeStruct((M, O_pad), out_dtype),
            grid=grid,
            in_specs=in_specs,
            out_specs=pl.BlockSpec((tm, O_pad), lambda i: (i, 0)),
            compiler_params=pltpu.CompilerParams(
                dimension_semantics=("parallel",),  # row tiles shard across TCs
                vmem_limit_bytes=vmem_limit,
            ),
            cost_estimate=cost,
        )(*flat_args)

    # Single-buffer the constant-index weight blocks only when doubling them is
    # actually material (large hidden dims); for small weights the default
    # double-buffering costs only a duplicate (tiny) VMEM buffer and no extra DMA.
    single_buffer_weights = (2 * wb_bytes) > (vmem_ceiling // 4)
    if single_buffer_weights:
        try:
            out_pad = _run(pl.Buffered(1), weight_buffers=1)
        except (TypeError, ValueError, NotImplementedError, pltpu.LoweringException):
            # pipeline_mode / buffer_count=1 unsupported -> default double buffering.
            out_pad = _run(None, weight_buffers=2)
    else:
        out_pad = _run(None, weight_buffers=2)

    return out_pad[:, :out_dim].reshape(B, L, out_dim)


def init_ffnn_params(key, embedding_dim, hidden_dim, output_dim, num_layers):
    """Parameter init matching the FFNN module's layer shapes.

    Layers: Linear(E,H), [Linear(H,H)] * (num_layers-1), Linear(H,O).
    Weights stored as (in_dim, out_dim) f32; biases as (1, out_dim) f32.
    """
    assert num_layers > 0
    dims = [(embedding_dim, hidden_dim)]
    dims += [(hidden_dim, hidden_dim)] * (num_layers - 1)
    dims += [(hidden_dim, output_dim)]

    params = []
    for (din, dout) in dims:
        key, wk, bk = jax.random.split(key, 3)
        scale = 1.0 / jnp.sqrt(jnp.float32(din))
        w = jax.random.uniform(wk, (din, dout), jnp.float32, -scale, scale)
        b = jax.random.uniform(bk, (1, dout), jnp.float32, -scale, scale)
        params.append((w, b))
    return params


def ffnn_reference_f32(embeddings, params):
    """Pure-f32 plain-JAX reference of the PyTorch forward."""
    h = embeddings
    for i, (w, b) in enumerate(params):
        h = jnp.einsum("ble,eo->blo", h, w) + b[0]
        if i < len(params) - 1:
            h = jax.nn.relu(h)
    return h


def ffnn_reference_matched(embeddings, params, compute_dtype=jnp.bfloat16):
    """Plain-JAX reference reproducing the kernel's bf16-in / f32-accumulate math."""
    h = embeddings
    for i, (w, b) in enumerate(params):
        h = (
            jnp.einsum(
                "ble,eo->blo",
                h.astype(compute_dtype),
                w.astype(compute_dtype),
                preferred_element_type=jnp.float32,
            )
            + b[0]
        )
        if i < len(params) - 1:
            h = jax.nn.relu(h)
    return h


if __name__ == "__main__":
    # Small shapes consistent with (batch_size, max_length, embedding_dim).
    batch, max_length = 2, 8
    embedding_dim, hidden_dim, output_dim, num_layers = 32, 32, 8, 2

    key = jax.random.PRNGKey(0)
    key, xk = jax.random.split(key)
    embeddings = jax.random.normal(
        xk, (batch, max_length, embedding_dim), jnp.float32
    )

    params = init_ffnn_params(
        key, embedding_dim, hidden_dim, output_dim, num_layers
    )

    logits = ffnn_forward(embeddings, params)
    logits = jax.block_until_ready(logits)

    assert logits.shape == (batch, max_length, output_dim)

    # Tight check against a reference doing the same mixed-precision math,
    # loose check against the pure-f32 PyTorch-equivalent reference.
    ref_matched = ffnn_reference_matched(embeddings, params)
    ref_f32 = ffnn_reference_f32(embeddings, params)
    assert jnp.allclose(logits, ref_matched, atol=1e-3, rtol=1e-3)
    assert jnp.allclose(logits, ref_f32, atol=5e-2, rtol=5e-2)

    print("KERNEL_OK")
</pallas_src>

<mosaic_0001>
module attributes {stable_mosaic.version = 11 : i64} {
  func.func @kernel(%arg0: i32, %arg1: memref<8x32xf32, #tpu.memory_space<vmem>>, %arg2: memref<32x128xbf16, #tpu.memory_space<vmem>>, %arg3: memref<1x128xf32, #tpu.memory_space<vmem>>, %arg4: memref<128x128xbf16, #tpu.memory_space<vmem>>, %arg5: memref<1x128xf32, #tpu.memory_space<vmem>>, %arg6: memref<128x128xbf16, #tpu.memory_space<vmem>>, %arg7: memref<1x128xf32, #tpu.memory_space<vmem>>, %arg8: memref<8x128xf32, #tpu.memory_space<vmem>>) attributes {dimension_semantics = [#tpu.dimension_semantics<parallel>], iteration_bounds = array<i64: 2>, scalar_prefetch = 0 : i64, scratch_operands = 0 : i64, tpu.core_type = #tpu.core_type<tc>, window_params = [{transform_indices = @transform_0, window_bounds = array<i64: 8, 32>}, {pipeline_mode = #tpu.pipeline_mode<synchronous>, transform_indices = @transform_1, window_bounds = array<i64: 32, 128>}, {pipeline_mode = #tpu.pipeline_mode<synchronous>, transform_indices = @transform_2, window_bounds = array<i64: 1, 128>}, {pipeline_mode = #tpu.pipeline_mode<synchronous>, transform_indices = @transform_3, window_bounds = array<i64: 128, 128>}, {pipeline_mode = #tpu.pipeline_mode<synchronous>, transform_indices = @transform_4, window_bounds = array<i64: 1, 128>}, {pipeline_mode = #tpu.pipeline_mode<synchronous>, transform_indices = @transform_5, window_bounds = array<i64: 128, 128>}, {pipeline_mode = #tpu.pipeline_mode<synchronous>, transform_indices = @transform_6, window_bounds = array<i64: 1, 128>}, {transform_indices = @transform_7, window_bounds = array<i64: 8, 128>}]} {
    %c0 = arith.constant 0 : index
    %c0_0 = arith.constant 0 : index
    %0 = vector.load %arg1[%c0, %c0_0] : memref<8x32xf32, #tpu.memory_space<vmem>>, vector<8x32xf32>
    %1 = arith.truncf %0 : vector<8x32xf32> to vector<8x32xbf16>
    %c0_1 = arith.constant 0 : index
    %c0_2 = arith.constant 0 : index
    %2 = vector.load %arg2[%c0_1, %c0_2] : memref<32x128xbf16, #tpu.memory_space<vmem>>, vector<32x128xbf16>
    %cst = arith.constant dense<0.000000e+00> : vector<8x128xf32>
    %3 = tpu.matmul %1, %2, %cst {dimension_numbers = #tpu.dot_dimension_numbers<[1], [0], [0], [1], [0, 0, 1, 1], [], []>} : vector<8x32xbf16>, vector<32x128xbf16>, vector<8x128xf32> -> vector<8x128xf32>
    %c0_3 = arith.constant 0 : index
    %c0_4 = arith.constant 0 : index
    %4 = vector.load %arg3[%c0_3, %c0_4] : memref<1x128xf32, #tpu.memory_space<vmem>>, vector<1x128xf32>
    %5 = vector.broadcast %4 : vector<1x128xf32> to vector<8x128xf32>
    %6 = arith.addf %3, %5 : vector<8x128xf32>
    %cst_5 = arith.constant 0.000000e+00 : f32
    %7 = vector.broadcast %cst_5 : f32 to vector<8x128xf32>
    %8 = arith.maximumf %6, %7 : vector<8x128xf32>
    %9 = arith.truncf %8 : vector<8x128xf32> to vector<8x128xbf16>
    %c0_6 = arith.constant 0 : index
    %c0_7 = arith.constant 0 : index
    %10 = vector.load %arg4[%c0_6, %c0_7] : memref<128x128xbf16, #tpu.memory_space<vmem>>, vector<128x128xbf16>
    %cst_8 = arith.constant dense<0.000000e+00> : vector<8x128xf32>
    %11 = tpu.matmul %9, %10, %cst_8 {dimension_numbers = #tpu.dot_dimension_numbers<[1], [0], [0], [1], [0, 0, 1, 1], [], []>} : vector<8x128xbf16>, vector<128x128xbf16>, vector<8x128xf32> -> vector<8x128xf32>
    %c0_9 = arith.constant 0 : index
    %c0_10 = arith.constant 0 : index
    %12 = vector.load %arg5[%c0_9, %c0_10] : memref<1x128xf32, #tpu.memory_space<vmem>>, vector<1x128xf32>
    %13 = vector.broadcast %12 : vector<1x128xf32> to vector<8x128xf32>
    %14 = arith.addf %11, %13 : vector<8x128xf32>
    %cst_11 = arith.constant 0.000000e+00 : f32
    %15 = vector.broadcast %cst_11 : f32 to vector<8x128xf32>
    %16 = arith.maximumf %14, %15 : vector<8x128xf32>
    %17 = arith.truncf %16 : vector<8x128xf32> to vector<8x128xbf16>
    %c0_12 = arith.constant 0 : index
    %c0_13 = arith.constant 0 : index
    %18 = vector.load %arg6[%c0_12, %c0_13] : memref<128x128xbf16, #tpu.memory_space<vmem>>, vector<128x128xbf16>
    %cst_14 = arith.constant dense<0.000000e+00> : vector<8x128xf32>
    %19 = tpu.matmul %17, %18, %cst_14 {dimension_numbers = #tpu.dot_dimension_numbers<[1], [0], [0], [1], [0, 0, 1, 1], [], []>} : vector<8x128xbf16>, vector<128x128xbf16>, vector<8x128xf32> -> vector<8x128xf32>
    %c0_15 = arith.constant 0 : index
    %c0_16 = arith.constant 0 : index
    %20 = vector.load %arg7[%c0_15, %c0_16] : memref<1x128xf32, #tpu.memory_space<vmem>>, vector<1x128xf32>
    %21 = vector.broadcast %20 : vector<1x128xf32> to vector<8x128xf32>
    %22 = arith.addf %19, %21 : vector<8x128xf32>
    %c0_17 = arith.constant 0 : index
    %c0_18 = arith.constant 0 : index
    %23 = vector.load %arg8[%c0_17, %c0_18] : memref<8x128xf32, #tpu.memory_space<vmem>>, vector<8x128xf32>
    tpu.vector_store %arg8[%c0_17, %c0_18], %22 {strides = array<i32>} : memref<8x128xf32, #tpu.memory_space<vmem>>, vector<8x128xf32>,
    return
  }
  func.func @transform_0(%arg0: i32) -> (i32, i32) {
    %c0_i32 = arith.constant 0 : i32
    %c0_i32_0 = arith.constant 0 : i32
    return %arg0, %c0_i32 : i32, i32
  }
  func.func @transform_1(%arg0: i32) -> (i32, i32) {
    %c0_i32 = arith.constant 0 : i32
    %c0_i32_0 = arith.constant 0 : i32
    %c0_i32_1 = arith.constant 0 : i32
    return %c0_i32, %c0_i32_0 : i32, i32
  }
  func.func @transform_2(%arg0: i32) -> (i32, i32) {
    %c0_i32 = arith.constant 0 : i32
    %c0_i32_0 = arith.constant 0 : i32
    %c0_i32_1 = arith.constant 0 : i32
    return %c0_i32, %c0_i32_0 : i32, i32
  }
  func.func @transform_3(%arg0: i32) -> (i32, i32) {
    %c0_i32 = arith.constant 0 : i32
    %c0_i32_0 = arith.constant 0 : i32
    %c0_i32_1 = arith.constant 0 : i32
    return %c0_i32, %c0_i32_0 : i32, i32
  }
  func.func @transform_4(%arg0: i32) -> (i32, i32) {
    %c0_i32 = arith.constant 0 : i32
    %c0_i32_0 = arith.constant 0 : i32
    %c0_i32_1 = arith.constant 0 : i32
    return %c0_i32, %c0_i32_0 : i32, i32
  }
  func.func @transform_5(%arg0: i32) -> (i32, i32) {
    %c0_i32 = arith.constant 0 : i32
    %c0_i32_0 = arith.constant 0 : i32
    %c0_i32_1 = arith.constant 0 : i32
    return %c0_i32, %c0_i32_0 : i32, i32
  }
  func.func @transform_6(%arg0: i32) -> (i32, i32) {
    %c0_i32 = arith.constant 0 : i32
    %c0_i32_0 = arith.constant 0 : i32
    %c0_i32_1 = arith.constant 0 : i32
    return %c0_i32, %c0_i32_0 : i32, i32
  }
  func.func @transform_7(%arg0: i32) -> (i32, i32) {
    %c0_i32 = arith.constant 0 : i32
    %c0_i32_0 = arith.constant 0 : i32
    return %arg0, %c0_i32 : i32, i32
  }
}

</mosaic_0001>

<llo_original>
// kernel: tpu_custom_call.1
$region0: #{tpu_custom_call.1}
  #allocation0 [shape = 'u32[]', space=smem, size = 0x4, offset = 0x4, fixed_abs, tag = 'smem constant byte address 0x4 - core index']
  #allocation1 [shape = 'u32[144,128]{1,0:T(1,128)}', space=vmem, size = 0x12000, scoped, tag = 'internal scratch']
  %s0 = inlined_call_operand.hbm [shape: f32[16,32], index: 0, kind: input, shape index: {}]
  %s1 = inlined_call_operand.hbm [shape: bf16[32,128], index: 1, kind: input, shape index: {}]
  %s2 = inlined_call_operand.vmem [shape: f32[1,128], index: 2, kind: input, shape index: {}]
  %s3 = inlined_call_operand.hbm [shape: bf16[128,128], index: 3, kind: input, shape index: {}]
  %s4 = inlined_call_operand.vmem [shape: f32[1,128], index: 4, kind: input, shape index: {}]
  %s5 = inlined_call_operand.hbm [shape: bf16[128,128], index: 5, kind: input, shape index: {}]
  %s6 = inlined_call_operand.vmem [shape: f32[1,128], index: 6, kind: input, shape index: {}]
  %s7 = inlined_call_operand.hbm [shape: f32[16,128], index: 7, kind: output, shape index: {}]
  %s8 = sld [smem:[#allocation0]]
  $region77: #{tpu_custom_call.1} parent=0
    _
  %s10 = ssub.s32 1, %s8
  %s11 = scalar_select 0, %s10, %s8
  $region1: #{tpu_custom_call.1} parent=0
    #allocation2 [shape = 'u8[8192]{0}', space=vmem, size = 0x2000, scoped, tag = 'input window, operand 0']
    #allocation3 [shape = 's32[2]{0}', space=sflag, size = 0x8, scoped, tag = 'scoped memory for tpu_custom_call.1']
    #allocation4 [shape = 's32[2]{0}', space=sflag, size = 0x8, scoped, tag = 'scoped memory for tpu_custom_call.1']
    #allocation5 [shape = 'u8[8192]{0}', space=vmem, size = 0x2000, scoped, tag = 'input window, operand 1, single buffered']
    #allocation6 [shape = 's32[1]{0}', space=sflag, size = 0x4, scoped, tag = 'scoped memory for tpu_custom_call.1']
    #allocation7 [shape = 'u8[32768]{0}', space=vmem, size = 0x8000, scoped, tag = 'input window, operand 3, single buffered']
    #allocation8 [shape = 'u8[32768]{0}', space=vmem, size = 0x8000, scoped, tag = 'input window, operand 5, single buffered']
    #allocation9 [shape = 's32[1]{0}', space=sflag, size = 0x4, scoped, tag = 'scoped memory for tpu_custom_call.1']
    #allocation10 [shape = 'u8[8192]{0}', space=vmem, size = 0x2000, scoped, tag = 'output window, operand 0']
    %12 = vsyncpa [#allocation3], 0
    %s13 = scalar_lea.sflag [#allocation3], 1
    %14 = vsyncpa %s13, 0
    %15 = vsyncpa [#allocation6], 0
    %16 = vsyncpa [#allocation9], 0
    %17 = vsyncpa [#allocation4], 0
    %s18 = scalar_lea.sflag [#allocation4], 1
    %19 = vsyncpa %s18, 0
    loop: start=0, step=1, limit=4
    $region2: #{tpu_custom_call.1} parent=1 // loop_pre_header
      _
    $region3: #{tpu_custom_call.1} parent=1 // loop_header
      %s21 = sphi 0, %s25
      %p22 = scmp.ge.s32.totalorder %s21, 4
      %s31 = sphi 0, %s33
      %s34 = sphi 0, %s31
      %s35 = sphi 0, %s34
      %s51 = sphi 0, %s35
      %s55 = sphi 0, %s55
      %s57 = sphi 0, %s55
      %s58 = sphi 0, %s57
      %s72 = sphi 0, %s58
      %s76 = sphi 0, %s76
      %s78 = sphi 0, %s76
      %s79 = sphi 0, %s78
      %s93 = sphi 0, %s79
      %s97 = sphi 0, %s97
      %s99 = sphi 0, %s97
      %s100 = sphi 0, %s99
      %s114 = sphi 0, %s100
      %s118 = sphi 0, %s118
      %s120 = sphi 0, %s118
      %s121 = sphi 0, %s120
      %s135 = sphi 0, %s121
      %s139 = sphi 0, %s139
      %s141 = sphi 0, %s139
      %s142 = sphi 0, %s141
      %s156 = sphi 0, %s142
      %s160 = sphi 0, %s160
      %s162 = sphi 0, %s160
      %s163 = sphi 0, %s162
      %s177 = sphi 0, %s163
      %s183 = sphi 0, %s185
      %s186 = sphi 0, %s183
      %s187 = sphi 0, %s186
      %s203 = sphi 0, %s187
    $region4: #{tpu_custom_call.1} parent=1 // loop_header_branch
      %24 = sbr.rel (%p22) target = $region8
    $region5: #{tpu_custom_call.1} parent=1 // loop_body
      %s26 = ssub.s32 %s21, 1
      %s27 = ssub.s32 %s21, 2
      %s28 = sadd.s32 %s21, 1
      %s29 = ssub.s32 %s21, %s28
      %p30 = scmp.eq.s32.totalorder %s29, 0
      %s32 = sadd.s32 %s31, 1
      %s33 = scalar_select %p30, %s31, %s32
      %p36 = pneg %p30
      %p37 = scmp.eq.s32.totalorder %s21, 1
      %p38 = por %p36, %p37
      %p39 = scmp.ne.s32.totalorder %s31, %s34
      %p40 = scmp.eq.s32.totalorder %s21, 0
      %p41 = por %p39, %p40
      %p42 = scmp.ne.s32.totalorder %s31, %s34
      %p43 = scmp.eq.s32.totalorder %s26, 1
      %p44 = por %p42, %p43
      %p45 = scmp.ne.s32.totalorder %s34, %s35
      %p46 = scmp.eq.s32.totalorder %s26, 0
      %p47 = por %p45, %p46
      %p48 = scmp.ne.s32.totalorder %s34, %s35
      %p49 = scmp.eq.s32.totalorder %s27, 1
      %p50 = por %p48, %p49
      %p52 = scmp.ne.s32.totalorder %s35, %s51
      %p53 = scmp.eq.s32.totalorder %s27, 0
      %p54 = por %p52, %p53
      %s56 = sadd.s32 %s55, 1
      %p59 = scmp.eq.s32.totalorder %s21, 1
      %p60 = scmp.ne.s32.totalorder %s55, %s57
      %p61 = scmp.eq.s32.totalorder %s21, 0
      %p62 = por %p60, %p61
      %p63 = scmp.ne.s32.totalorder %s55, %s57
      %p64 = scmp.eq.s32.totalorder %s26, 1
      %p65 = por %p63, %p64
      %p66 = scmp.ne.s32.totalorder %s57, %s58
      %p67 = scmp.eq.s32.totalorder %s26, 0
      %p68 = por %p66, %p67
      %p69 = scmp.ne.s32.totalorder %s57, %s58
      %p70 = scmp.eq.s32.totalorder %s27, 1
      %p71 = por %p69, %p70
      %p73 = scmp.ne.s32.totalorder %s58, %s72
      %p74 = scmp.eq.s32.totalorder %s27, 0
      %p75 = por %p73, %p74
      %s77 = sadd.s32 %s76, 1
      %p80 = scmp.eq.s32.totalorder %s21, 1
      %p81 = scmp.ne.s32.totalorder %s76, %s78
      %p82 = scmp.eq.s32.totalorder %s21, 0
      %p83 = por %p81, %p82
      %p84 = scmp.ne.s32.totalorder %s76, %s78
      %p85 = scmp.eq.s32.totalorder %s26, 1
      %p86 = por %p84, %p85
      %p87 = scmp.ne.s32.totalorder %s78, %s79
      %p88 = scmp.eq.s32.totalorder %s26, 0
      %p89 = por %p87, %p88
      %p90 = scmp.ne.s32.totalorder %s78, %s79
      %p91 = scmp.eq.s32.totalorder %s27, 1
      %p92 = por %p90, %p91
      %p94 = scmp.ne.s32.totalorder %s79, %s93
      %p95 = scmp.eq.s32.totalorder %s27, 0
      %p96 = por %p94, %p95
      %s98 = sadd.s32 %s97, 1
      %p101 = scmp.eq.s32.totalorder %s21, 1
      %p102 = scmp.ne.s32.totalorder %s97, %s99
      %p103 = scmp.eq.s32.totalorder %s21, 0
      %p104 = por %p102, %p103
      %p105 = scmp.ne.s32.totalorder %s97, %s99
      %p106 = scmp.eq.s32.totalorder %s26, 1
      %p107 = por %p105, %p106
      %p108 = scmp.ne.s32.totalorder %s99, %s100
      %p109 = scmp.eq.s32.totalorder %s26, 0
      %p110 = por %p108, %p109
      %p111 = scmp.ne.s32.totalorder %s99, %s100
      %p112 = scmp.eq.s32.totalorder %s27, 1
      %p113 = por %p111, %p112
      %p115 = scmp.ne.s32.totalorder %s100, %s114
      %p116 = scmp.eq.s32.totalorder %s27, 0
      %p117 = por %p115, %p116
      %s119 = sadd.s32 %s118, 1
      %p122 = scmp.eq.s32.totalorder %s21, 1
      %p123 = scmp.ne.s32.totalorder %s118, %s120
      %p124 = scmp.eq.s32.totalorder %s21, 0
      %p125 = por %p123, %p124
      %p126 = scmp.ne.s32.totalorder %s118, %s120
      %p127 = scmp.eq.s32.totalorder %s26, 1
      %p128 = por %p126, %p127
      %p129 = scmp.ne.s32.totalorder %s120, %s121
      %p130 = scmp.eq.s32.totalorder %s26, 0
      %p131 = por %p129, %p130
      %p132 = scmp.ne.s32.totalorder %s120, %s121
      %p133 = scmp.eq.s32.totalorder %s27, 1
      %p134 = por %p132, %p133
      %p136 = scmp.ne.s32.totalorder %s121, %s135
      %p137 = scmp.eq.s32.totalorder %s27, 0
      %p138 = por %p136, %p137
      %s140 = sadd.s32 %s139, 1
      %p143 = scmp.eq.s32.totalorder %s21, 1
      %p144 = scmp.ne.s32.totalorder %s139, %s141
      %p145 = scmp.eq.s32.totalorder %s21, 0
      %p146 = por %p144, %p145
      %p147 = scmp.ne.s32.totalorder %s139, %s141
      %p148 = scmp.eq.s32.totalorder %s26, 1
      %p149 = por %p147, %p148
      %p150 = scmp.ne.s32.totalorder %s141, %s142
      %p151 = scmp.eq.s32.totalorder %s26, 0
      %p152 = por %p150, %p151
      %p153 = scmp.ne.s32.totalorder %s141, %s142
      %p154 = scmp.eq.s32.totalorder %s27, 1
      %p155 = por %p153, %p154
      %p157 = scmp.ne.s32.totalorder %s142, %s156
      %p158 = scmp.eq.s32.totalorder %s27, 0
      %p159 = por %p157, %p158
      %s161 = sadd.s32 %s160, 1
      %p164 = scmp.eq.s32.totalorder %s21, 1
      %p165 = scmp.ne.s32.totalorder %s160, %s162
      %p166 = scmp.eq.s32.totalorder %s21, 0
      %p167 = por %p165, %p166
      %p168 = scmp.ne.s32.totalorder %s160, %s162
      %p169 = scmp.eq.s32.totalorder %s26, 1
      %p170 = por %p168, %p169
      %p171 = scmp.ne.s32.totalorder %s162, %s163
      %p172 = scmp.eq.s32.totalorder %s26, 0
      %p173 = por %p171, %p172
      %p174 = scmp.ne.s32.totalorder %s162, %s163
      %p175 = scmp.eq.s32.totalorder %s27, 1
      %p176 = por %p174, %p175
      %p178 = scmp.ne.s32.totalorder %s163, %s177
      %p179 = scmp.eq.s32.totalorder %s27, 0
      %p180 = por %p178, %p179
      %s181 = ssub.s32 %s21, %s28
      %p182 = scmp.eq.s32.totalorder %s181, 0
      %s184 = sadd.s32 %s183, 1
      %s185 = scalar_select %p182, %s183, %s184
      %p188 = pneg %p182
      %p189 = scmp.eq.s32.totalorder %s21, 1
      %p190 = por %p188, %p189
      %p191 = scmp.ne.s32.totalorder %s183, %s186
      %p192 = scmp.eq.s32.totalorder %s21, 0
      %p193 = por %p191, %p192
      %p194 = scmp.ne.s32.totalorder %s183, %s186
      %p195 = scmp.eq.s32.totalorder %s26, 1
      %p196 = por %p194, %p195
      %p197 = scmp.ne.s32.totalorder %s186, %s187
      %p198 = scmp.eq.s32.totalorder %s26, 0
      %p199 = por %p197, %p198
      %p200 = scmp.ne.s32.totalorder %s186, %s187
      %p201 = scmp.eq.s32.totalorder %s27, 1
      %p202 = por %p200, %p201
      %p204 = scmp.ne.s32.totalorder %s187, %s203
      %p205 = scmp.eq.s32.totalorder %s27, 0
      %p206 = por %p204, %p205
      %p207 = scmp.le.s32.totalorder 1, %s21
      %p208 = scmp.lt.s32.totalorder %s21, 3
      %p209 = pnand %p207, %p208
      %p210 = pneg %p209
      // Predicated region
      $region9: #{tpu_custom_call.1} parent=5 // pred_check
        _
      $region10: #{tpu_custom_call.1} parent=5 // pred_check_branch
        %212 = sbr.rel (%p209) target = $region12
      $region11: #{tpu_custom_call.1} parent=5 // pred_region
        %s213 = ssub.s32 %s21, 1
        // Predicated region
        $region13: #{tpu_custom_call.1} parent=11 // pred_check
          %p214 = pneg %p68
        $region14: #{tpu_custom_call.1} parent=11 // pred_check_branch
          %216 = sbr.rel (%p214) target = $region16
        $region15: #{tpu_custom_call.1} parent=11 // pred_region
          %s218 = ssub.s32 256, 256
          %219 = vsyncadd [#allocation6], %s218
          %s220 = sshll.u32 [#allocation5], 4
          %s221 = int_to_ptr.vmem [resolvable:$true] %s220
          %226 = dma.hbm_to_vmem [thread:$0]  %s1, 256, %s221, [#allocation6], 64, 64, 4
        $region16: #{tpu_custom_call.1} parent=11 // pred_fallthru
          _
        // Predicated region
        $region17: #{tpu_custom_call.1} parent=11 // pred_check
          %p227 = pneg %p89
        $region18: #{tpu_custom_call.1} parent=11 // pred_check_branch
          %229 = sbr.rel (%p227) target = $region20
        $region19: #{tpu_custom_call.1} parent=11 // pred_region
          _
        $region20: #{tpu_custom_call.1} parent=11 // pred_fallthru
          _
        // Predicated region
        $region21: #{tpu_custom_call.1} parent=11 // pred_check
          %p230 = pneg %p110
        $region22: #{tpu_custom_call.1} parent=11 // pred_check_branch
          %232 = sbr.rel (%p230) target = $region24
        $region23: #{tpu_custom_call.1} parent=11 // pred_region
          %s234 = ssub.s32 1024, 1024
          %235 = vsyncadd [#allocation6], %s234
          %s236 = sshll.u32 [#allocation7], 4
          %s237 = int_to_ptr.vmem [resolvable:$true] %s236
          %242 = dma.hbm_to_vmem [thread:$0]  %s3, 1024, %s237, [#allocation6], 64, 64, 4
        $region24: #{tpu_custom_call.1} parent=11 // pred_fallthru
          _
        // Predicated region
        $region25: #{tpu_custom_call.1} parent=11 // pred_check
          %p243 = pneg %p131
        $region26: #{tpu_custom_call.1} parent=11 // pred_check_branch
          %245 = sbr.rel (%p243) target = $region28
        $region27: #{tpu_custom_call.1} parent=11 // pred_region
          _
        $region28: #{tpu_custom_call.1} parent=11 // pred_fallthru
          _
        // Predicated region
        $region29: #{tpu_custom_call.1} parent=11 // pred_check
          %p246 = pneg %p152
        $region30: #{tpu_custom_call.1} parent=11 // pred_check_branch
          %248 = sbr.rel (%p246) target = $region32
        $region31: #{tpu_custom_call.1} parent=11 // pred_region
          %s250 = ssub.s32 1024, 1024
          %251 = vsyncadd [#allocation9], %s250
          %s252 = sshll.u32 [#allocation8], 4
          %s253 = int_to_ptr.vmem [resolvable:$true] %s252
          %258 = dma.hbm_to_vmem [thread:$0]  %s5, 1024, %s253, [#allocation9], 64, 64, 4
        $region32: #{tpu_custom_call.1} parent=11 // pred_fallthru
          _
        // Predicated region
        $region33: #{tpu_custom_call.1} parent=11 // pred_check
          %p259 = pneg %p173
        $region34: #{tpu_custom_call.1} parent=11 // pred_check_branch
          %261 = sbr.rel (%p259) target = $region36
        $region35: #{tpu_custom_call.1} parent=11 // pred_region
          _
        $region36: #{tpu_custom_call.1} parent=11 // pred_fallthru
          _
      $region12: #{tpu_custom_call.1} parent=5 // pred_fallthru
        _
      %p262 = scmp.lt.s32.totalorder %s21, 2
      // Predicated region
      $region37: #{tpu_custom_call.1} parent=5 // pred_check
        %p263 = pneg %p262
      $region38: #{tpu_custom_call.1} parent=5 // pred_check_branch
        %265 = sbr.rel (%p263) target = $region40
      $region39: #{tpu_custom_call.1} parent=5 // pred_region
        // Predicated region
        $region41: #{tpu_custom_call.1} parent=39 // pred_check
          %p266 = pneg %p41
        $region42: #{tpu_custom_call.1} parent=39 // pred_check_branch
          %268 = sbr.rel (%p266) target = $region44
        $region43: #{tpu_custom_call.1} parent=39 // pred_region
          %s269 = sand.u32 %s31, 1
          %s270 = scalar_lea.sflag [#allocation3], %s269
          %s271 = sand.u32 %s31, 1
          %s272 = smul.addr %s271, 8
          %s273 = scalar_lea.vmem [#allocation2], %s272
          %s275 = ssub.s32 128, 128
          %276 = vsyncadd %s270, %s275
          %s277 = smul.addr %s21, 128
          %s278 = scalar_lea.hbm %s0, %s277
          %s280 = sshll.u32 %s273, 4
          %s281 = int_to_ptr.vmem [resolvable:$true] %s280
          %283 = dma.hbm_to_vmem [thread:$0]  %s278, 128, %s281, %s270
        $region44: #{tpu_custom_call.1} parent=39 // pred_fallthru
          _
      $region40: #{tpu_custom_call.1} parent=5 // pred_fallthru
        _
      %p284 = scmp.le.s32.totalorder 1, %s21
      %p285 = scmp.lt.s32.totalorder %s21, 3
      %p286 = pnand %p284, %p285
      %p287 = pneg %p286
      // Predicated region
      $region45: #{tpu_custom_call.1} parent=5 // pred_check
        _
      $region46: #{tpu_custom_call.1} parent=5 // pred_check_branch
        %289 = sbr.rel (%p286) target = $region48
      $region47: #{tpu_custom_call.1} parent=5 // pred_region
        %s290 = ssub.s32 %s21, 1
        %s291 = sand.u32 %s34, 1
        %s292 = scalar_lea.sflag [#allocation3], %s291
        %s293 = sand.u32 %s34, 1
        %s294 = smul.addr %s293, 8
        %s295 = scalar_lea.vmem [#allocation2], %s294
        // Predicated region
        $region49: #{tpu_custom_call.1} parent=47 // pred_check
          %p296 = pneg %p47
        $region50: #{tpu_custom_call.1} parent=47 // pred_check_branch
          %298 = sbr.rel (%p296) target = $region52
        $region51: #{tpu_custom_call.1} parent=47 // pred_region
          %299 = dma.done %s292, 128
        $region52: #{tpu_custom_call.1} parent=47 // pred_fallthru
          _
        // Predicated region
        $region53: #{tpu_custom_call.1} parent=47 // pred_check
          %p300 = pneg %p68
        $region54: #{tpu_custom_call.1} parent=47 // pred_check_branch
          %302 = sbr.rel (%p300) target = $region56
        $region55: #{tpu_custom_call.1} parent=47 // pred_region
          %303 = dma.done [#allocation6], 256
        $region56: #{tpu_custom_call.1} parent=47 // pred_fallthru
          _
        // Predicated region
        $region57: #{tpu_custom_call.1} parent=47 // pred_check
          %p304 = pneg %p110
        $region58: #{tpu_custom_call.1} parent=47 // pred_check_branch
          %306 = sbr.rel (%p304) target = $region60
        $region59: #{tpu_custom_call.1} parent=47 // pred_region
          %307 = dma.done [#allocation6], 1024
        $region60: #{tpu_custom_call.1} parent=47 // pred_fallthru
          _
        // Predicated region
        $region61: #{tpu_custom_call.1} parent=47 // pred_check
          %p308 = pneg %p152
        $region62: #{tpu_custom_call.1} parent=47 // pred_check_branch
          %310 = sbr.rel (%p308) target = $region64
        $region63: #{tpu_custom_call.1} parent=47 // pred_region
          %311 = dma.done [#allocation9], 1024
        $region64: #{tpu_custom_call.1} parent=47 // pred_fallthru
          _
        %s312 = sand.u32 %s34, 1
        %s313 = scalar_lea.sflag [#allocation3], %s312
        %s314 = sand.u32 %s34, 1
        %s315 = smul.addr %s314, 8
        %s316 = scalar_lea.vmem [#allocation2], %s315
        %p317 = pneg %p47
        %p318 = pneg %p44
        %p319 = pneg %p68
        %p320 = pneg %p65
        %p321 = pneg %p89
        %p322 = pneg %p86
        %p323 = pneg %p110
        %p324 = pneg %p107
        %p325 = pneg %p131
        %p326 = pneg %p128
        %p327 = pneg %p152
        %p328 = pneg %p149
        %p329 = pneg %p173
        %p330 = pneg %p170
        %p331 = pneg %p199
        %p332 = pneg %p196
        %s333 = sand.u32 %s186, 1
        %s334 = scalar_lea.sflag [#allocation4], %s333
        %s335 = sand.u32 %s186, 1
        %s336 = smul.addr %s335, 8
        %s337 = scalar_lea.vmem [#allocation10], %s336
        %v339 = vld [vmem:[%s295] sm:$0xff]
        %v340 = vpack.c.bf16 %v339, %v339
        %v341 = vld [vmem:[#allocation5] sm:$0xf]
        %v342 = vld [vmem:[#allocation5 + $0x4] sm:$0xf]
        %v343 = vld [vmem:[#allocation5 + $0x8] sm:$0xf]
        %v344 = vld [vmem:[#allocation5 + $0xc] sm:$0xf]
        %v345 = vld [vmem:[%s2] sm:$0x1]
        %v347 = vlaneseq
        %v348 = vshrl.u32 %v347, 7
        %v349 = vsub.s32 0, %v348
        %v350 = vrot.slane %v345, %v349
        %v356 = vunpack.c.l.b16 %v341
        %v357 = vunpack.c.l.b16 %v342
        %v358 = vunpack.c.l.b16 %v343
        %v359 = vunpack.c.l.b16 %v344
        %v360 = vpack.c.b16 %v357, %v356
        %v361 = vpack.c.b16 %v359, %v358
        %vm364 = vcmask 261120
        %v366 = vsel %vm364, %v340, 0
        %368 = vmatprep.subr.bf16.mxu0 0
        %369 = vmatpush1.bf16.msra.mxu0 %v360
        %370 = vmatprep.subr.bf16.mxu0 0
        %371 = vmatpush1.bf16.msra.mxu0 %v361
        %372 = vmatprep.subr.bf16.mxu0 0
        %373 = vmatpush1.bf16.msra.mxu0 0
        %374 = vmatprep.subr.bf16.mxu0 0
        %375 = vmatpush1.bf16.msra.mxu0 0
        %376 = vmatprep.subr.bf16.mxu0 0
        %377 = vmatpush1.bf16.msra.mxu0 0
        %378 = vmatprep.subr.bf16.mxu0 0
        %379 = vmatpush1.bf16.msra.mxu0 0
        %380 = vmatprep.subr.bf16.mxu0 0
        %381 = vmatpush1.bf16.msra.mxu0 0
        %382 = vmatprep.subr.bf16.mxu0 0
        %383 = vmatpush1.bf16.msra.mxu0 0
        %384 = vmatprep.subr.bf16.mxu0 0
        %385 = vmatpush1.bf16.msra.mxu0 0
        %386 = vmatprep.subr.bf16.mxu0 0
        %387 = vmatpush1.bf16.msra.mxu0 0
        %388 = vmatprep.subr.bf16.mxu0 0
        %389 = vmatpush1.bf16.msra.mxu0 0
        %390 = vmatprep.subr.bf16.mxu0 0
        %391 = vmatpush1.bf16.msra.mxu0 0
        %392 = vmatprep.subr.bf16.mxu0 0
        %393 = vmatpush1.bf16.msra.mxu0 0
        %394 = vmatprep.subr.bf16.mxu0 0
        %395 = vmatpush1.bf16.msra.mxu0 0
        %396 = vmatprep.subr.bf16.mxu0 0
        %397 = vmatpush1.bf16.msra.mxu0 0
        %398 = vmatprep.subr.bf16.mxu0 0
        %399 = vmatpush1.bf16.msra.mxu0 0
        %400 = vmatprep.mubr.bf16.mxu0 0
        %401 = vmatmul.mubr.bf16.gmra.mrb[0].mxu0 %v366
        %v402 = vpop.f32.mrb[0].mxu0
        %v403 = vadd.f32 %v350, %v402
        %v404 = vpop.f32.mrb[0].mxu0
        %v405 = vpop.f32.mrb[0].mxu0
        %v406 = vpop.f32.mrb[0].mxu0
        %407 = vdwg.mxu0
        %v408 = vmax.f32 %v403, 0.0
        %v409 = vpack.c.bf16 %v408, %v408
        %v410 = vld [vmem:[#allocation7] sm:$0xf]
        %v411 = vld [vmem:[#allocation7 + $0x4] sm:$0xf]
        %v412 = vld [vmem:[#allocation7 + $0x8] sm:$0xf]
        %v413 = vld [vmem:[#allocation7 + $0xc] sm:$0xf]
        %v414 = vld [vmem:[#allocation7 + $0x10] sm:$0xf]
        %v415 = vld [vmem:[#allocation7 + $0x14] sm:$0xf]
        %v416 = vld [vmem:[#allocation7 + $0x18] sm:$0xf]
        %v417 = vld [vmem:[#allocation7 + $0x1c] sm:$0xf]
        %v418 = vld [vmem:[#allocation7 + $0x20] sm:$0xf]
        %v419 = vld [vmem:[#allocation7 + $0x24] sm:$0xf]
        %v420 = vld [vmem:[#allocation7 + $0x28] sm:$0xf]
        %v421 = vld [vmem:[#allocation7 + $0x2c] sm:$0xf]
        %v422 = vld [vmem:[#allocation7 + $0x30] sm:$0xf]
        %v423 = vld [vmem:[#allocation7 + $0x34] sm:$0xf]
        %v424 = vld [vmem:[#allocation7 + $0x38] sm:$0xf]
        %v425 = vld [vmem:[#allocation7 + $0x3c] sm:$0xf]
        %v426 = vld [vmem:[%s4] sm:$0x1]
        %v428 = vlaneseq
        %v429 = vshrl.u32 %v428, 7
        %v430 = vsub.s32 0, %v429
        %v431 = vrot.slane %v426, %v430
        %v449 = vunpack.c.l.b16 %v410
        %v450 = vunpack.c.l.b16 %v411
        %v451 = vunpack.c.l.b16 %v412
        %v452 = vunpack.c.l.b16 %v413
        %v453 = vunpack.c.l.b16 %v414
        %v454 = vunpack.c.l.b16 %v415
        %v455 = vunpack.c.l.b16 %v416
        %v456 = vunpack.c.l.b16 %v417
        %v457 = vunpack.c.l.b16 %v418
        %v458 = vunpack.c.l.b16 %v419
        %v459 = vunpack.c.l.b16 %v420
        %v460 = vunpack.c.l.b16 %v421
        %v461 = vunpack.c.l.b16 %v422
        %v462 = vunpack.c.l.b16 %v423
        %v463 = vunpack.c.l.b16 %v424
        %v464 = vunpack.c.l.b16 %v425
        %v465 = vpack.c.b16 %v450, %v449
        %v466 = vpack.c.b16 %v452, %v451
        %v467 = vpack.c.b16 %v454, %v453
        %v468 = vpack.c.b16 %v456, %v455
        %v469 = vpack.c.b16 %v458, %v457
        %v470 = vpack.c.b16 %v460, %v459
        %v471 = vpack.c.b16 %v462, %v461
        %v472 = vpack.c.b16 %v464, %v463
        %481 = vmatprep.subr.bf16.mxu0 0
        %482 = vmatpush1.bf16.msra.mxu0 %v465
        %483 = vmatprep.subr.bf16.mxu0 0
        %484 = vmatpush1.bf16.msra.mxu0 %v466
        %485 = vmatprep.subr.bf16.mxu0 0
        %486 = vmatpush1.bf16.msra.mxu0 %v467
        %487 = vmatprep.subr.bf16.mxu0 0
        %488 = vmatpush1.bf16.msra.mxu0 %v468
        %489 = vmatprep.subr.bf16.mxu0 0
        %490 = vmatpush1.bf16.msra.mxu0 %v469
        %491 = vmatprep.subr.bf16.mxu0 0
        %492 = vmatpush1.bf16.msra.mxu0 %v470
        %493 = vmatprep.subr.bf16.mxu0 0
        %494 = vmatpush1.bf16.msra.mxu0 %v471
        %495 = vmatprep.subr.bf16.mxu0 0
        %496 = vmatpush1.bf16.msra.mxu0 %v472
        %497 = vmatprep.subr.bf16.mxu0 0
        %498 = vmatpush1.bf16.msra.mxu0 0
        %499 = vmatprep.subr.bf16.mxu0 0
        %500 = vmatpush1.bf16.msra.mxu0 0
        %501 = vmatprep.subr.bf16.mxu0 0
        %502 = vmatpush1.bf16.msra.mxu0 0
        %503 = vmatprep.subr.bf16.mxu0 0
        %504 = vmatpush1.bf16.msra.mxu0 0
        %505 = vmatprep.subr.bf16.mxu0 0
        %506 = vmatpush1.bf16.msra.mxu0 0
        %507 = vmatprep.subr.bf16.mxu0 0
        %508 = vmatpush1.bf16.msra.mxu0 0
        %509 = vmatprep.subr.bf16.mxu0 0
        %510 = vmatpush1.bf16.msra.mxu0 0
        %511 = vmatprep.subr.bf16.mxu0 0
        %512 = vmatpush1.bf16.msra.mxu0 0
        %513 = vmatprep.mubr.bf16.mxu0 0
        %514 = vmatmul.mubr.bf16.gmra.mrb[0].mxu0 %v409
        %v515 = vpop.f32.mrb[0].mxu0
        %v516 = vadd.f32 %v431, %v515
        %v517 = vpop.f32.mrb[0].mxu0
        %v518 = vpop.f32.mrb[0].mxu0
        %v519 = vpop.f32.mrb[0].mxu0
        %520 = vdwg.mxu0
        %v521 = vmax.f32 %v516, 0.0
        %v522 = vpack.c.bf16 %v521, %v521
        %v523 = vld [vmem:[#allocation8] sm:$0xf]
        %v524 = vld [vmem:[#allocation8 + $0x4] sm:$0xf]
        %v525 = vld [vmem:[#allocation8 + $0x8] sm:$0xf]
        %v526 = vld [vmem:[#allocation8 + $0xc] sm:$0xf]
        %v527 = vld [vmem:[#allocation8 + $0x10] sm:$0xf]
        %v528 = vld [vmem:[#allocation8 + $0x14] sm:$0xf]
        %v529 = vld [vmem:[#allocation8 + $0x18] sm:$0xf]
        %v530 = vld [vmem:[#allocation8 + $0x1c] sm:$0xf]
        %v531 = vld [vmem:[#allocation8 + $0x20] sm:$0xf]
        %v532 = vld [vmem:[#allocation8 + $0x24] sm:$0xf]
        %v533 = vld [vmem:[#allocation8 + $0x28] sm:$0xf]
        %v534 = vld [vmem:[#allocation8 + $0x2c] sm:$0xf]
        %v535 = vld [vmem:[#allocation8 + $0x30] sm:$0xf]
        %v536 = vld [vmem:[#allocation8 + $0x34] sm:$0xf]
        %v537 = vld [vmem:[#allocation8 + $0x38] sm:$0xf]
        %v538 = vld [vmem:[#allocation8 + $0x3c] sm:$0xf]
        %v539 = vld [vmem:[%s6] sm:$0x1]
        %v541 = vlaneseq
        %v542 = vshrl.u32 %v541, 7
        %v543 = vsub.s32 0, %v542
        %v544 = vrot.slane %v539, %v543
        %v562 = vunpack.c.l.b16 %v523
        %v563 = vunpack.c.l.b16 %v524
        %v564 = vunpack.c.l.b16 %v525
        %v565 = vunpack.c.l.b16 %v526
        %v566 = vunpack.c.l.b16 %v527
        %v567 = vunpack.c.l.b16 %v528
        %v568 = vunpack.c.l.b16 %v529
        %v569 = vunpack.c.l.b16 %v530
        %v570 = vunpack.c.l.b16 %v531
        %v571 = vunpack.c.l.b16 %v532
        %v572 = vunpack.c.l.b16 %v533
        %v573 = vunpack.c.l.b16 %v534
        %v574 = vunpack.c.l.b16 %v535
        %v575 = vunpack.c.l.b16 %v536
        %v576 = vunpack.c.l.b16 %v537
        %v577 = vunpack.c.l.b16 %v538
        %v578 = vpack.c.b16 %v563, %v562
        %v579 = vpack.c.b16 %v565, %v564
        %v580 = vpack.c.b16 %v567, %v566
        %v581 = vpack.c.b16 %v569, %v568
        %v582 = vpack.c.b16 %v571, %v570
        %v583 = vpack.c.b16 %v573, %v572
        %v584 = vpack.c.b16 %v575, %v574
        %v585 = vpack.c.b16 %v577, %v576
        %594 = vmatprep.subr.bf16.mxu0 0
        %595 = vmatpush1.bf16.msra.mxu0 %v578
        %596 = vmatprep.subr.bf16.mxu0 0
        %597 = vmatpush1.bf16.msra.mxu0 %v579
        %598 = vmatprep.subr.bf16.mxu0 0
        %599 = vmatpush1.bf16.msra.mxu0 %v580
        %600 = vmatprep.subr.bf16.mxu0 0
        %601 = vmatpush1.bf16.msra.mxu0 %v581
        %602 = vmatprep.subr.bf16.mxu0 0
        %603 = vmatpush1.bf16.msra.mxu0 %v582
        %604 = vmatprep.subr.bf16.mxu0 0
        %605 = vmatpush1.bf16.msra.mxu0 %v583
        %606 = vmatprep.subr.bf16.mxu0 0
        %607 = vmatpush1.bf16.msra.mxu0 %v584
        %608 = vmatprep.subr.bf16.mxu0 0
        %609 = vmatpush1.bf16.msra.mxu0 %v585
        %610 = vmatprep.subr.bf16.mxu0 0
        %611 = vmatpush1.bf16.msra.mxu0 0
        %612 = vmatprep.subr.bf16.mxu0 0
        %613 = vmatpush1.bf16.msra.mxu0 0
        %614 = vmatprep.subr.bf16.mxu0 0
        %615 = vmatpush1.bf16.msra.mxu0 0
        %616 = vmatprep.subr.bf16.mxu0 0
        %617 = vmatpush1.bf16.msra.mxu0 0
        %618 = vmatprep.subr.bf16.mxu0 0
        %619 = vmatpush1.bf16.msra.mxu0 0
        %620 = vmatprep.subr.bf16.mxu0 0
        %621 = vmatpush1.bf16.msra.mxu0 0
        %622 = vmatprep.subr.bf16.mxu0 0
        %623 = vmatpush1.bf16.msra.mxu0 0
        %624 = vmatprep.subr.bf16.mxu0 0
        %625 = vmatpush1.bf16.msra.mxu0 0
        %626 = vmatprep.mubr.bf16.mxu0 0
        %627 = vmatmul.mubr.bf16.gmra.mrb[0].mxu0 %v522
        %v628 = vpop.f32.mrb[0].mxu0
        %v629 = vadd.f32 %v544, %v628
        %v630 = vpop.f32.mrb[0].mxu0
        %v631 = vpop.f32.mrb[0].mxu0
        %v632 = vpop.f32.mrb[0].mxu0
        %633 = vdwg.mxu0
        %634 = vst [vmem:[%s337] sm:$0xff] %v629
        %s635 = sand.u32 %s186, 1
        %s636 = scalar_lea.sflag [#allocation4], %s635
        %s637 = sand.u32 %s186, 1
        %s638 = smul.addr %s637, 8
        %s639 = scalar_lea.vmem [#allocation10], %s638
        // Predicated region
        $region65: #{tpu_custom_call.1} parent=47 // pred_check
          %p640 = pneg %p196
        $region66: #{tpu_custom_call.1} parent=47 // pred_check_branch
          %642 = sbr.rel (%p640) target = $region68
        $region67: #{tpu_custom_call.1} parent=47 // pred_region
          %s644 = ssub.s32 128, 128
          %645 = vsyncadd %s636, %s644
          %s646 = smul.addr %s26, 128
          %s647 = scalar_lea.hbm %s7, %s646
          %s649 = sshll.u32 %s639, 4
          %s650 = int_to_ptr.vmem [resolvable:$true] %s649
          %652 = dma.vmem_to_hbm [thread:$0]  %s650, 128, %s647, %s636
        $region68: #{tpu_custom_call.1} parent=47 // pred_fallthru
          _
      $region48: #{tpu_custom_call.1} parent=5 // pred_fallthru
        _
      %p653 = scmp.le.s32.totalorder 2, %s21
      // Predicated region
      $region69: #{tpu_custom_call.1} parent=5 // pred_check
        %p654 = pneg %p653
      $region70: #{tpu_custom_call.1} parent=5 // pred_check_branch
        %656 = sbr.rel (%p654) target = $region72
      $region71: #{tpu_custom_call.1} parent=5 // pred_region
        %s657 = ssub.s32 %s21, 2
        // Predicated region
        $region73: #{tpu_custom_call.1} parent=71 // pred_check
          %p658 = pneg %p202
        $region74: #{tpu_custom_call.1} parent=71 // pred_check_branch
          %660 = sbr.rel (%p658) target = $region76
        $region75: #{tpu_custom_call.1} parent=71 // pred_region
          %s661 = sand.u32 %s187, 1
          %s662 = scalar_lea.sflag [#allocation4], %s661
          %s663 = sand.u32 %s187, 1
          %s664 = smul.addr %s663, 8
          %s665 = scalar_lea.vmem [#allocation10], %s664
          %666 = dma.done %s662, 128
        $region76: #{tpu_custom_call.1} parent=71 // pred_fallthru
          _
      $region72: #{tpu_custom_call.1} parent=5 // pred_fallthru
        _
    $region6: #{tpu_custom_call.1} parent=1 // loop_footer
      %s25 = sadd.s32 1, %s21
    $region7: #{tpu_custom_call.1} parent=1 // loop_footer_branch
      %20 = sbr.rel target = $region3
    $region8: #{tpu_custom_call.1} parent=1 // loop_exit
      _
    %667 = vsyncpa [#allocation3], 1
    %s668 = scalar_lea.sflag [#allocation3], 1
    %669 = vsyncpa %s668, 1
    %670 = vsyncpa [#allocation6], 1
    %671 = vsyncpa [#allocation9], 1
    %672 = vsyncpa [#allocation4], 1
    %s673 = scalar_lea.sflag [#allocation4], 1
    %674 = vsyncpa %s673, 1

</llo_original>
